<compile_context>
chip_gen: v7x
topology: tpu7x:2x2x1
jax: 0.10.0
libtpu: 0.0.40
codegen_flags: <defaults>
</compile_context>

<pallas_src>
import functools

import jax
import jax.numpy as jnp
from jax import lax
from jax.experimental import pallas as pl
from jax.experimental.pallas import tpu as pltpu

EMBEDDING_DIM = 16
NUM_HEADS = 4
E = EMBEDDING_DIM * 4          # 64 = attention embed_dim
HEAD_DIM = E // NUM_HEADS      # 16
FC1_DIM = 16


def _recipe_kernel(xq_ref, k_ref, uaug_ref, wq_ref, bq_ref, out_ref):
    """One query tile: q-projection + 4-head attention, lane-dense output.

    xq_ref  : (TB, E)  bf16   query rows for this grid step
    k_ref   : (B,  E)  bf16   full-sequence keys (precomputed, resident)
    uaug_ref: (2H, B)  bf16   rows 2h = fold weights u_h, rows 2h+1 = ones
    wq_ref  : (E,  E)  bf16   query projection (1/sqrt(d) folded in)
    bq_ref  : (1,  E)  f32
    out_ref : (1, TB)  f32
    """
    xq = xq_ref[...]                                    # (TB, E)
    k = k_ref[...]                                      # (B, E)
    uaug = uaug_ref[...]                                # (2H, B)

    q = jnp.dot(xq, wq_ref[...],
                preferred_element_type=jnp.float32) + bq_ref[...]      # (TB, E)
    qb = q.astype(jnp.bfloat16)

    acc = jnp.zeros((1, xq.shape[0]), jnp.float32)       # (1, TB)
    for h in range(NUM_HEADS):                           # static unroll
        lo, hi = h * HEAD_DIM, (h + 1) * HEAD_DIM
        # Transposed scores: contract head_dim of K against head_dim of Q
        # -> (B, TB), query axis on lanes.  No explicit transpose.
        s = lax.dot_general(k[:, lo:hi], qb[:, lo:hi],
                            dimension_numbers=(((1,), (1,)), ((), ())),
                            preferred_element_type=jnp.float32)        # (B, TB)
        m = jnp.max(s, axis=0, keepdims=True)                          # (1, TB)
        p = jnp.exp(s - m).astype(jnp.bfloat16)                        # (B, TB)
        # One bf16 MXU dot gives numerator (row 0) and denominator (row 1).
        nd = jnp.dot(uaug[2 * h:2 * h + 2, :], p,
                     preferred_element_type=jnp.float32)               # (2, TB)
        acc = acc + nd[0:1, :] * pl.reciprocal(nd[1:2, :], approx=True)

    out_ref[...] = jax.nn.sigmoid(acc) * 5.0             # bias already folded


def init_params(key, num_recipes, num_authors, max_calories, max_review_counts):
    ks = jax.random.split(key, 16)
    scale = 0.02

    def w(k, shape):
        return (scale * jax.random.normal(k, shape)).astype(jnp.float32)

    return {
        # embedding tables
        "recipe_emb":  w(ks[0], (num_recipes, EMBEDDING_DIM)),
        "author_emb":  w(ks[1], (num_authors, EMBEDDING_DIM)),
        "calorie_emb": w(ks[2], (max_calories, EMBEDDING_DIM)),
        "review_emb":  w(ks[3], (max_review_counts, EMBEDDING_DIM)),
        # MultiheadAttention in/out projections, stored transposed: (in, out)
        "wq": w(ks[4], (E, E)), "bq": w(ks[10], (1, E)),
        "wk": w(ks[5], (E, E)), "bk": w(ks[11], (1, E)),
        "wv": w(ks[6], (E, E)), "bv": w(ks[12], (1, E)),
        "wo": w(ks[7], (E, E)), "bo": w(ks[13], (1, E)),
        # fc1 / fc2
        "w1": w(ks[8], (E, FC1_DIM)), "b1": w(ks[14], (1, FC1_DIM)),
        "w2": w(ks[9], (FC1_DIM, 1)), "b2": w(ks[15], (1, 1)),
    }


def fuse_params(params):
    """One-time parameter prep.

    * 1/sqrt(head_dim) folded into wq/bq.
    * wo @ w1 @ w2 folded to a single (E,1) weight + scalar bias (exact:
      there is no nonlinearity between out_proj, fc1 and fc2 in the spec).
    * head-concat folded away via a block-diagonal (E,H) weight.
    * wv folded THROUGH the block-diagonal weight: w_u = wv @ wf_block,
      b_u = bv @ wf_block, so the kernel never materializes V.
    * final scalar bias folded into b_u / NUM_HEADS (softmax rows sum to 1).
    * 4 embedding tables stacked so the gather is a single take().
    """
    scale = 1.0 / jnp.sqrt(jnp.float32(HEAD_DIM))

    wq = params["wq"] * scale
    bq = params["bq"] * scale

    # Exact fold of out_proj -> fc1 -> fc2.
    wf = params["wo"] @ params["w1"] @ params["w2"]                    # (E, 1)
    bf = (params["bo"] @ params["w1"] @ params["w2"]
          + params["b1"] @ params["w2"] + params["b2"])                # (1, 1)

    # Block-diagonal fold weight: (V @ wf_block)[:, h] = V_h @ wf[lo:hi].
    mask = jnp.repeat(jnp.eye(NUM_HEADS, dtype=jnp.float32), HEAD_DIM, axis=0)
    wf_block = mask * wf                                               # (E, H)

    # Fold the value projection straight into the output path.
    w_u = params["wv"] @ wf_block                                      # (E, H)
    b_u = params["bv"] @ wf_block + bf / NUM_HEADS                     # (1, H)

    tables = [params["recipe_emb"], params["author_emb"],
              params["calorie_emb"], params["review_emb"]]
    sizes = [t.shape[0] for t in tables]
    offsets = jnp.array([0, sizes[0], sizes[0] + sizes[1],
                         sizes[0] + sizes[1] + sizes[2]], dtype=jnp.int32)

    return {
        "emb_table": jnp.concatenate(tables, axis=0),                  # (R, 16)
        "emb_offsets": offsets,                                        # (4,)
        "wq": wq.astype(jnp.bfloat16), "bq": bq.astype(jnp.float32),
        "wk": params["wk"].astype(jnp.float32),
        "bk": params["bk"].astype(jnp.float32),
        "w_u": w_u.astype(jnp.float32),
        "b_u": b_u.astype(jnp.float32),
    }


@functools.partial(jax.jit, static_argnames=("block_q",))
def recipe_model_forward(fused, recipe_id, author_id, calories, review_counts,
                         block_q=256):
    # Single gather from the stacked table (replaces 4 gathers + lane concat).
    idx = jnp.stack(
        [recipe_id.astype(jnp.int32) + fused["emb_offsets"][0],
         author_id.astype(jnp.int32) + fused["emb_offsets"][1],
         calories.astype(jnp.int32) + fused["emb_offsets"][2],
         review_counts.astype(jnp.int32) + fused["emb_offsets"][3]], axis=-1)
    x = jnp.take(fused["emb_table"], idx, axis=0)                      # (B, 4, 16)
    x = x.reshape(x.shape[0], E)                                       # (B, 64) f32
    B = x.shape[0]

    # --- Query-independent, full-sequence work: computed ONCE (hoisted). ---
    k = (x @ fused["wk"] + fused["bk"]).astype(jnp.bfloat16)           # (B, E)
    u = x @ fused["w_u"] + fused["b_u"]                                # (B, H) f32
    # Interleave a ones row per head: rows 2h = u_h, rows 2h+1 = 1  -> (2H, B).
    uaug = jnp.stack([u.T, jnp.ones((NUM_HEADS, B), u.dtype)], axis=1)
    uaug = uaug.reshape(2 * NUM_HEADS, B).astype(jnp.bfloat16)

    xq = x.astype(jnp.bfloat16)                                        # (B, E)

    # Query tile: whole batch when tiny; otherwise a sublane-aligned tile with
    # at least 2 grid steps so v7x's two TensorCores both get work.
    if B >= 16:
        half = -(-B // 2)
        half = -(-half // 8) * 8
        TB = min(block_q, half)
    else:
        TB = B
    num_tiles = -(-B // TB)
    B_pad = num_tiles * TB
    if B_pad != B:
        # Pad query rows only (K / u_aug keep the true sequence length); the
        # padded output rows are sliced off below.
        xq = jnp.pad(xq, ((0, B_pad - B), (0, 0)))

    full = lambda i: (0, 0)
    in_specs = [
        pl.BlockSpec((TB, E), lambda i: (i, 0)),          # query tile
        pl.BlockSpec((B, E), full),                       # resident keys
        pl.BlockSpec((2 * NUM_HEADS, B), full),           # resident fold weights
        pl.BlockSpec(fused["wq"].shape, full),
        pl.BlockSpec(fused["bq"].shape, full),
    ]
    out_spec = pl.BlockSpec((1, TB), lambda i: (0, i))    # lane-dense output row

    out = pl.pallas_call(
        _recipe_kernel,
        out_shape=jax.ShapeDtypeStruct((1, B_pad), jnp.float32),
        grid=(num_tiles,),
        in_specs=in_specs,
        out_specs=out_spec,
        compiler_params=pltpu.CompilerParams(
            dimension_semantics=("parallel",),
            vmem_limit_bytes=32 * 1024 * 1024),
    )(xq, k, uaug, fused["wq"], fused["bq"])

    return out[0, :B]                                                  # (B,)


def _reference_forward(params, recipe_id, author_id, calories, review_counts):
    """Pure-JAX f32 reference reproducing the PyTorch module exactly."""
    rec = jnp.take(params["recipe_emb"], recipe_id, axis=0)
    aut = jnp.take(params["author_emb"], author_id, axis=0)
    cal = jnp.take(params["calorie_emb"], calories.astype(jnp.int32), axis=0)
    rev = jnp.take(params["review_emb"], review_counts.astype(jnp.int32), axis=0)
    x = jnp.concatenate([rec, aut, cal, rev], axis=-1)                 # (B, E)
    q = x @ params["wq"] + params["bq"]
    k = x @ params["wk"] + params["bk"]
    v = x @ params["wv"] + params["bv"]
    scale = 1.0 / jnp.sqrt(jnp.float32(HEAD_DIM))
    outs = []
    for h in range(NUM_HEADS):
        lo, hi = h * HEAD_DIM, (h + 1) * HEAD_DIM
        s = (q[:, lo:hi] @ k[:, lo:hi].T) * scale
        outs.append(jax.nn.softmax(s, axis=-1) @ v[:, lo:hi])
    attn = jnp.concatenate(outs, axis=-1) @ params["wo"] + params["bo"]
    h1 = attn @ params["w1"] + params["b1"]
    h2 = h1 @ params["w2"] + params["b2"]
    return (jax.nn.sigmoid(h2) * 5.0).reshape(-1)


if __name__ == "__main__":
    num_recipes, num_authors = 100, 50
    max_calories, max_review_counts = 200, 300
    B = 8

    key = jax.random.PRNGKey(0)
    pkey, k1, k2, k3, k4 = jax.random.split(key, 5)
    params = init_params(pkey, num_recipes, num_authors, max_calories,
                         max_review_counts)
    fused = fuse_params(params)

    recipe_id = jax.random.randint(k1, (B,), 0, num_recipes, dtype=jnp.int32)
    author_id = jax.random.randint(k2, (B,), 0, num_authors, dtype=jnp.int32)
    calories = jax.random.randint(k3, (B,), 0, max_calories, dtype=jnp.int32)
    review_counts = jax.random.randint(k4, (B,), 0, max_review_counts,
                                       dtype=jnp.int32)

    out = recipe_model_forward(fused, recipe_id, author_id, calories,
                               review_counts)
    jax.block_until_ready(out)
    assert out.shape == (B,)

    ref = _reference_forward(params, recipe_id, author_id, calories,
                             review_counts)
    max_err = float(jnp.max(jnp.abs(out - ref)))
    assert max_err < 5e-2, f"mismatch vs reference: {max_err}"
    print("KERNEL_OK")
</pallas_src>

<mosaic_0001>
module attributes {stable_mosaic.version = 11 : i64} {
  func.func @_recipe_kernel(%arg0: i32, %arg1: memref<8x64xbf16, #tpu.memory_space<vmem>>, %arg2: memref<8x64xbf16, #tpu.memory_space<vmem>>, %arg3: memref<8x8xbf16, #tpu.memory_space<vmem>>, %arg4: memref<64x64xbf16, #tpu.memory_space<vmem>>, %arg5: memref<1x64xf32, #tpu.memory_space<vmem>>, %arg6: memref<1x8xf32, #tpu.memory_space<vmem>>) attributes {dimension_semantics = [#tpu.dimension_semantics<parallel>], iteration_bounds = array<i64: 1>, scalar_prefetch = 0 : i64, scratch_operands = 0 : i64, tpu.core_type = #tpu.core_type<tc>, window_params = [{transform_indices = @transform_0, window_bounds = array<i64: 8, 64>}, {pipeline_mode = #tpu.pipeline_mode<synchronous>, transform_indices = @transform_1, window_bounds = array<i64: 8, 64>}, {pipeline_mode = #tpu.pipeline_mode<synchronous>, transform_indices = @transform_2, window_bounds = array<i64: 8, 8>}, {pipeline_mode = #tpu.pipeline_mode<synchronous>, transform_indices = @transform_3, window_bounds = array<i64: 64, 64>}, {pipeline_mode = #tpu.pipeline_mode<synchronous>, transform_indices = @transform_4, window_bounds = array<i64: 1, 64>}, {transform_indices = @transform_5, window_bounds = array<i64: 1, 8>}]} {
    %c0 = arith.constant 0 : index
    %c0_0 = arith.constant 0 : index
    %0 = vector.load %arg1[%c0, %c0_0] : memref<8x64xbf16, #tpu.memory_space<vmem>>, vector<8x64xbf16>
    %c0_1 = arith.constant 0 : index
    %c0_2 = arith.constant 0 : index
    %1 = vector.load %arg2[%c0_1, %c0_2] : memref<8x64xbf16, #tpu.memory_space<vmem>>, vector<8x64xbf16>
    %c0_3 = arith.constant 0 : index
    %c0_4 = arith.constant 0 : index
    %2 = vector.load %arg3[%c0_3, %c0_4] : memref<8x8xbf16, #tpu.memory_space<vmem>>, vector<8x8xbf16>
    %c0_5 = arith.constant 0 : index
    %c0_6 = arith.constant 0 : index
    %3 = vector.load %arg4[%c0_5, %c0_6] : memref<64x64xbf16, #tpu.memory_space<vmem>>, vector<64x64xbf16>
    %cst = arith.constant dense<0.000000e+00> : vector<8x64xf32>
    %4 = tpu.matmul %0, %3, %cst {dimension_numbers = #tpu.dot_dimension_numbers<[1], [0], [0], [1], [0, 0, 1, 1], [], []>} : vector<8x64xbf16>, vector<64x64xbf16>, vector<8x64xf32> -> vector<8x64xf32>
    %c0_7 = arith.constant 0 : index
    %c0_8 = arith.constant 0 : index
    %5 = vector.load %arg5[%c0_7, %c0_8] : memref<1x64xf32, #tpu.memory_space<vmem>>, vector<1x64xf32>
    %6 = vector.broadcast %5 : vector<1x64xf32> to vector<8x64xf32>
    %7 = arith.addf %4, %6 : vector<8x64xf32>
    %8 = arith.truncf %7 : vector<8x64xf32> to vector<8x64xbf16>
    %cst_9 = arith.constant 0.000000e+00 : f32
    %9 = vector.broadcast %cst_9 : f32 to vector<1x8xf32>
    %10 = vector.extract_strided_slice %1 {offsets = [0, 0], sizes = [8, 16], strides = [1, 1]} : vector<8x64xbf16> to vector<8x16xbf16>
    %11 = vector.extract_strided_slice %8 {offsets = [0, 0], sizes = [8, 16], strides = [1, 1]} : vector<8x64xbf16> to vector<8x16xbf16>
    %cst_10 = arith.constant dense<0.000000e+00> : vector<8x8xf32>
    %12 = tpu.matmul %10, %11, %cst_10 {dimension_numbers = #tpu.dot_dimension_numbers<[1], [1], [0], [0], [0, 0, 1, 0], [], []>} : vector<8x16xbf16>, vector<8x16xbf16>, vector<8x8xf32> -> vector<8x8xf32>
    %cst_11 = arith.constant dense<0xFF800000> : vector<8xf32>
    %13 = vector.multi_reduction <maximumf>, %12, %cst_11 [0] : vector<8x8xf32> to vector<8xf32>
    %14 = vector.shape_cast %13 : vector<8xf32> to vector<1x8xf32>
    %15 = vector.broadcast %14 : vector<1x8xf32> to vector<8x8xf32>
    %16 = arith.subf %12, %15 : vector<8x8xf32>
    %17 = math.exp %16 : vector<8x8xf32>
    %18 = arith.truncf %17 : vector<8x8xf32> to vector<8x8xbf16>
    %19 = vector.extract_strided_slice %2 {offsets = [0, 0], sizes = [2, 8], strides = [1, 1]} : vector<8x8xbf16> to vector<2x8xbf16>
    %cst_12 = arith.constant dense<0.000000e+00> : vector<2x8xf32>
    %20 = tpu.matmul %19, %18, %cst_12 {dimension_numbers = #tpu.dot_dimension_numbers<[1], [0], [0], [1], [0, 0, 1, 1], [], []>} : vector<2x8xbf16>, vector<8x8xbf16>, vector<2x8xf32> -> vector<2x8xf32>
    %21 = vector.extract_strided_slice %20 {offsets = [0, 0], sizes = [1, 8], strides = [1, 1]} : vector<2x8xf32> to vector<1x8xf32>
    %22 = vector.extract_strided_slice %20 {offsets = [1, 0], sizes = [1, 8], strides = [1, 1]} : vector<2x8xf32> to vector<1x8xf32>
    %23 = tpu.reciprocal %22 {approx = true} : vector<1x8xf32> -> vector<1x8xf32>
    %24 = arith.mulf %21, %23 : vector<1x8xf32>
    %25 = arith.addf %9, %24 : vector<1x8xf32>
    %26 = vector.extract_strided_slice %1 {offsets = [0, 16], sizes = [8, 16], strides = [1, 1]} : vector<8x64xbf16> to vector<8x16xbf16>
    %27 = vector.extract_strided_slice %8 {offsets = [0, 16], sizes = [8, 16], strides = [1, 1]} : vector<8x64xbf16> to vector<8x16xbf16>
    %cst_13 = arith.constant dense<0.000000e+00> : vector<8x8xf32>
    %28 = tpu.matmul %26, %27, %cst_13 {dimension_numbers = #tpu.dot_dimension_numbers<[1], [1], [0], [0], [0, 0, 1, 0], [], []>} : vector<8x16xbf16>, vector<8x16xbf16>, vector<8x8xf32> -> vector<8x8xf32>
    %cst_14 = arith.constant dense<0xFF800000> : vector<8xf32>
    %29 = vector.multi_reduction <maximumf>, %28, %cst_14 [0] : vector<8x8xf32> to vector<8xf32>
    %30 = vector.shape_cast %29 : vector<8xf32> to vector<1x8xf32>
    %31 = vector.broadcast %30 : vector<1x8xf32> to vector<8x8xf32>
    %32 = arith.subf %28, %31 : vector<8x8xf32>
    %33 = math.exp %32 : vector<8x8xf32>
    %34 = arith.truncf %33 : vector<8x8xf32> to vector<8x8xbf16>
    %35 = vector.extract_strided_slice %2 {offsets = [2, 0], sizes = [2, 8], strides = [1, 1]} : vector<8x8xbf16> to vector<2x8xbf16>
    %cst_15 = arith.constant dense<0.000000e+00> : vector<2x8xf32>
    %36 = tpu.matmul %35, %34, %cst_15 {dimension_numbers = #tpu.dot_dimension_numbers<[1], [0], [0], [1], [0, 0, 1, 1], [], []>} : vector<2x8xbf16>, vector<8x8xbf16>, vector<2x8xf32> -> vector<2x8xf32>
    %37 = vector.extract_strided_slice %36 {offsets = [0, 0], sizes = [1, 8], strides = [1, 1]} : vector<2x8xf32> to vector<1x8xf32>
    %38 = vector.extract_strided_slice %36 {offsets = [1, 0], sizes = [1, 8], strides = [1, 1]} : vector<2x8xf32> to vector<1x8xf32>
    %39 = tpu.reciprocal %38 {approx = true} : vector<1x8xf32> -> vector<1x8xf32>
    %40 = arith.mulf %37, %39 : vector<1x8xf32>
    %41 = arith.addf %25, %40 : vector<1x8xf32>
    %42 = vector.extract_strided_slice %1 {offsets = [0, 32], sizes = [8, 16], strides = [1, 1]} : vector<8x64xbf16> to vector<8x16xbf16>
    %43 = vector.extract_strided_slice %8 {offsets = [0, 32], sizes = [8, 16], strides = [1, 1]} : vector<8x64xbf16> to vector<8x16xbf16>
    %cst_16 = arith.constant dense<0.000000e+00> : vector<8x8xf32>
    %44 = tpu.matmul %42, %43, %cst_16 {dimension_numbers = #tpu.dot_dimension_numbers<[1], [1], [0], [0], [0, 0, 1, 0], [], []>} : vector<8x16xbf16>, vector<8x16xbf16>, vector<8x8xf32> -> vector<8x8xf32>
    %cst_17 = arith.constant dense<0xFF800000> : vector<8xf32>
    %45 = vector.multi_reduction <maximumf>, %44, %cst_17 [0] : vector<8x8xf32> to vector<8xf32>
    %46 = vector.shape_cast %45 : vector<8xf32> to vector<1x8xf32>
    %47 = vector.broadcast %46 : vector<1x8xf32> to vector<8x8xf32>
    %48 = arith.subf %44, %47 : vector<8x8xf32>
    %49 = math.exp %48 : vector<8x8xf32>
    %50 = arith.truncf %49 : vector<8x8xf32> to vector<8x8xbf16>
    %51 = vector.extract_strided_slice %2 {offsets = [4, 0], sizes = [2, 8], strides = [1, 1]} : vector<8x8xbf16> to vector<2x8xbf16>
    %cst_18 = arith.constant dense<0.000000e+00> : vector<2x8xf32>
    %52 = tpu.matmul %51, %50, %cst_18 {dimension_numbers = #tpu.dot_dimension_numbers<[1], [0], [0], [1], [0, 0, 1, 1], [], []>} : vector<2x8xbf16>, vector<8x8xbf16>, vector<2x8xf32> -> vector<2x8xf32>
    %53 = vector.extract_strided_slice %52 {offsets = [0, 0], sizes = [1, 8], strides = [1, 1]} : vector<2x8xf32> to vector<1x8xf32>
    %54 = vector.extract_strided_slice %52 {offsets = [1, 0], sizes = [1, 8], strides = [1, 1]} : vector<2x8xf32> to vector<1x8xf32>
    %55 = tpu.reciprocal %54 {approx = true} : vector<1x8xf32> -> vector<1x8xf32>
    %56 = arith.mulf %53, %55 : vector<1x8xf32>
    %57 = arith.addf %41, %56 : vector<1x8xf32>
    %58 = vector.extract_strided_slice %1 {offsets = [0, 48], sizes = [8, 16], strides = [1, 1]} : vector<8x64xbf16> to vector<8x16xbf16>
    %59 = vector.extract_strided_slice %8 {offsets = [0, 48], sizes = [8, 16], strides = [1, 1]} : vector<8x64xbf16> to vector<8x16xbf16>
    %cst_19 = arith.constant dense<0.000000e+00> : vector<8x8xf32>
    %60 = tpu.matmul %58, %59, %cst_19 {dimension_numbers = #tpu.dot_dimension_numbers<[1], [1], [0], [0], [0, 0, 1, 0], [], []>} : vector<8x16xbf16>, vector<8x16xbf16>, vector<8x8xf32> -> vector<8x8xf32>
    %cst_20 = arith.constant dense<0xFF800000> : vector<8xf32>
    %61 = vector.multi_reduction <maximumf>, %60, %cst_20 [0] : vector<8x8xf32> to vector<8xf32>
    %62 = vector.shape_cast %61 : vector<8xf32> to vector<1x8xf32>
    %63 = vector.broadcast %62 : vector<1x8xf32> to vector<8x8xf32>
    %64 = arith.subf %60, %63 : vector<8x8xf32>
    %65 = math.exp %64 : vector<8x8xf32>
    %66 = arith.truncf %65 : vector<8x8xf32> to vector<8x8xbf16>
    %67 = vector.extract_strided_slice %2 {offsets = [6, 0], sizes = [2, 8], strides = [1, 1]} : vector<8x8xbf16> to vector<2x8xbf16>
    %cst_21 = arith.constant dense<0.000000e+00> : vector<2x8xf32>
    %68 = tpu.matmul %67, %66, %cst_21 {dimension_numbers = #tpu.dot_dimension_numbers<[1], [0], [0], [1], [0, 0, 1, 1], [], []>} : vector<2x8xbf16>, vector<8x8xbf16>, vector<2x8xf32> -> vector<2x8xf32>
    %69 = vector.extract_strided_slice %68 {offsets = [0, 0], sizes = [1, 8], strides = [1, 1]} : vector<2x8xf32> to vector<1x8xf32>
    %70 = vector.extract_strided_slice %68 {offsets = [1, 0], sizes = [1, 8], strides = [1, 1]} : vector<2x8xf32> to vector<1x8xf32>
    %71 = tpu.reciprocal %70 {approx = true} : vector<1x8xf32> -> vector<1x8xf32>
    %72 = arith.mulf %69, %71 : vector<1x8xf32>
    %73 = arith.addf %57, %72 : vector<1x8xf32>
    %74 = arith.negf %73 : vector<1x8xf32>
    %75 = math.exp %74 : vector<1x8xf32>
    %cst_22 = arith.constant 1.000000e+00 : f32
    %76 = vector.broadcast %cst_22 : f32 to vector<1x8xf32>
    %77 = arith.addf %76, %75 : vector<1x8xf32>
    %78 = arith.divf %76, %77 : vector<1x8xf32>
    %cst_23 = arith.constant 5.000000e+00 : f32
    %79 = vector.broadcast %cst_23 : f32 to vector<1x8xf32>
    %80 = arith.mulf %78, %79 : vector<1x8xf32>
    %c0_24 = arith.constant 0 : index
    %c0_25 = arith.constant 0 : index
    %81 = vector.load %arg6[%c0_24, %c0_25] : memref<1x8xf32, #tpu.memory_space<vmem>>, vector<1x8xf32>
    tpu.vector_store %arg6[%c0_24, %c0_25], %80 {strides = array<i32>} : memref<1x8xf32, #tpu.memory_space<vmem>>, vector<1x8xf32>,
    return
  }
  func.func @transform_0(%arg0: i32) -> (i32, i32) {
    %c0_i32 = arith.constant 0 : i32
    %c0_i32_0 = arith.constant 0 : i32
    return %arg0, %c0_i32 : i32, i32
  }
  func.func @transform_1(%arg0: i32) -> (i32, i32) {
    %c0_i32 = arith.constant 0 : i32
    %c0_i32_0 = arith.constant 0 : i32
    %c0_i32_1 = arith.constant 0 : i32
    return %c0_i32, %c0_i32_0 : i32, i32
  }
  func.func @transform_2(%arg0: i32) -> (i32, i32) {
    %c0_i32 = arith.constant 0 : i32
    %c0_i32_0 = arith.constant 0 : i32
    %c0_i32_1 = arith.constant 0 : i32
    return %c0_i32, %c0_i32_0 : i32, i32
  }
  func.func @transform_3(%arg0: i32) -> (i32, i32) {
    %c0_i32 = arith.constant 0 : i32
    %c0_i32_0 = arith.constant 0 : i32
    %c0_i32_1 = arith.constant 0 : i32
    return %c0_i32, %c0_i32_0 : i32, i32
  }
  func.func @transform_4(%arg0: i32) -> (i32, i32) {
    %c0_i32 = arith.constant 0 : i32
    %c0_i32_0 = arith.constant 0 : i32
    %c0_i32_1 = arith.constant 0 : i32
    return %c0_i32, %c0_i32_0 : i32, i32
  }
  func.func @transform_5(%arg0: i32) -> (i32, i32) {
    %c0_i32 = arith.constant 0 : i32
    %c0_i32_0 = arith.constant 0 : i32
    return %c0_i32, %arg0 : i32, i32
  }
}

</mosaic_0001>

<llo_original>
// kernel: recipe_model_forward.1
$region0: #{recipe_model_forward.1}
  #allocation0 [shape = 'u32[]', space=smem, size = 0x4, offset = 0x4, fixed_abs, tag = 'smem constant byte address 0x4 - core index']
  #allocation1 [shape = 'u32[144,128]{1,0:T(1,128)}', space=vmem, size = 0x12000, scoped, tag = 'internal scratch']
  %s0 = inlined_call_operand.vmem [shape: bf16[8,64], index: 0, kind: input, shape index: {}]
  %s1 = inlined_call_operand.vmem [shape: bf16[8,64], index: 1, kind: input, shape index: {}]
  %s2 = inlined_call_operand.vmem [shape: bf16[8,8], index: 2, kind: input, shape index: {}]
  %s3 = inlined_call_operand.vmem [shape: bf16[64,64], index: 3, kind: input, shape index: {}]
  %s4 = inlined_call_operand.vmem [shape: f32[1,64], index: 4, kind: input, shape index: {}]
  %s5 = inlined_call_operand.hbm [shape: f32[1,8], index: 5, kind: output, shape index: {}]
  %s6 = sld [smem:[#allocation0]]
  $region30: #{recipe_model_forward.1} parent=0
    _
  %s8 = ssub.s32 1, %s6
  %s9 = scalar_select 0, %s8, %s6
  $region1: #{recipe_model_forward.1} parent=0
    #allocation2 [shape = 'u8[512]{0}', space=vmem, size = 0x400, scoped, tag = 'output window, operand 0, single buffered']
    #allocation3 [shape = 's32[1]{0}', space=sflag, size = 0x4, scoped, tag = 'scoped memory for recipe_model_forward.1']
    %10 = vsyncpa [#allocation3], 0
    // Predicated region
    $region2: #{recipe_model_forward.1} parent=1 // pred_check
      _
    $region3: #{recipe_model_forward.1} parent=1 // pred_check_branch
      %12 = sbr.rel (0) target = $region5
    $region4: #{recipe_model_forward.1} parent=1 // pred_region
      _
    $region5: #{recipe_model_forward.1} parent=1 // pred_fallthru
      _
    // Predicated region
    $region6: #{recipe_model_forward.1} parent=1 // pred_check
      _
    $region7: #{recipe_model_forward.1} parent=1 // pred_check_branch
      %14 = sbr.rel (0) target = $region9
    $region8: #{recipe_model_forward.1} parent=1 // pred_region
      _
    $region9: #{recipe_model_forward.1} parent=1 // pred_fallthru
      _
    // Predicated region
    $region10: #{recipe_model_forward.1} parent=1 // pred_check
      _
    $region11: #{recipe_model_forward.1} parent=1 // pred_check_branch
      %16 = sbr.rel (0) target = $region13
    $region12: #{recipe_model_forward.1} parent=1 // pred_region
      _
    $region13: #{recipe_model_forward.1} parent=1 // pred_fallthru
      _
    // Predicated region
    $region14: #{recipe_model_forward.1} parent=1 // pred_check
      _
    $region15: #{recipe_model_forward.1} parent=1 // pred_check_branch
      %18 = sbr.rel (0) target = $region17
    $region16: #{recipe_model_forward.1} parent=1 // pred_region
      _
    $region17: #{recipe_model_forward.1} parent=1 // pred_fallthru
      _
    // Predicated region
    $region18: #{recipe_model_forward.1} parent=1 // pred_check
      _
    $region19: #{recipe_model_forward.1} parent=1 // pred_check_branch
      %20 = sbr.rel (0) target = $region21
    $region20: #{recipe_model_forward.1} parent=1 // pred_region
      _
    $region21: #{recipe_model_forward.1} parent=1 // pred_fallthru
      _
    %v22 = vld [vmem:[%s0] sm:$0xf]
    %v23 = vld [vmem:[%s1] sm:$0xf]
    %v24 = vld [vmem:[%s2] sm:$0xf]
    %v25 = vld [vmem:[%s3] sm:$0xf]
    %v26 = vld [vmem:[%s3 + $0x4] sm:$0xf]
    %v27 = vld [vmem:[%s3 + $0x8] sm:$0xf]
    %v28 = vld [vmem:[%s3 + $0xc] sm:$0xf]
    %v29 = vld [vmem:[%s3 + $0x10] sm:$0xf]
    %v30 = vld [vmem:[%s3 + $0x14] sm:$0xf]
    %v31 = vld [vmem:[%s3 + $0x18] sm:$0xf]
    %v32 = vld [vmem:[%s3 + $0x1c] sm:$0xf]
    %v33 = vld [vmem:[%s4] sm:$0x1]
    %v35 = vlaneseq
    %v36 = vshrl.u32 %v35, 7
    %v37 = vsub.s32 0, %v36
    %v38 = vrot.slane %v33, %v37
    %v48 = vunpack.c.l.b16 %v25
    %v49 = vunpack.c.l.b16 %v26
    %v50 = vunpack.c.l.b16 %v27
    %v51 = vunpack.c.l.b16 %v28
    %v52 = vunpack.c.l.b16 %v29
    %v53 = vunpack.c.l.b16 %v30
    %v54 = vunpack.c.l.b16 %v31
    %v55 = vunpack.c.l.b16 %v32
    %v56 = vpack.c.b16 %v49, %v48
    %v57 = vpack.c.b16 %v51, %v50
    %v58 = vpack.c.b16 %v53, %v52
    %v59 = vpack.c.b16 %v55, %v54
    %vm64 = vcmask 523264
    %v66 = vsel %vm64, %v22, 0
    %68 = vmatprep.subr.bf16.mxu0 0
    %69 = vmatpush1.bf16.msra.mxu0 %v56
    %70 = vmatprep.subr.bf16.mxu0 0
    %71 = vmatpush1.bf16.msra.mxu0 %v57
    %72 = vmatprep.subr.bf16.mxu0 0
    %73 = vmatpush1.bf16.msra.mxu0 %v58
    %74 = vmatprep.subr.bf16.mxu0 0
    %75 = vmatpush1.bf16.msra.mxu0 %v59
    %76 = vmatprep.subr.bf16.mxu0 0
    %77 = vmatpush1.bf16.msra.mxu0 0
    %78 = vmatprep.subr.bf16.mxu0 0
    %79 = vmatpush1.bf16.msra.mxu0 0
    %80 = vmatprep.subr.bf16.mxu0 0
    %81 = vmatpush1.bf16.msra.mxu0 0
    %82 = vmatprep.subr.bf16.mxu0 0
    %83 = vmatpush1.bf16.msra.mxu0 0
    %84 = vmatprep.subr.bf16.mxu0 0
    %85 = vmatpush1.bf16.msra.mxu0 0
    %86 = vmatprep.subr.bf16.mxu0 0
    %87 = vmatpush1.bf16.msra.mxu0 0
    %88 = vmatprep.subr.bf16.mxu0 0
    %89 = vmatpush1.bf16.msra.mxu0 0
    %90 = vmatprep.subr.bf16.mxu0 0
    %91 = vmatpush1.bf16.msra.mxu0 0
    %92 = vmatprep.subr.bf16.mxu0 0
    %93 = vmatpush1.bf16.msra.mxu0 0
    %94 = vmatprep.subr.bf16.mxu0 0
    %95 = vmatpush1.bf16.msra.mxu0 0
    %96 = vmatprep.subr.bf16.mxu0 0
    %97 = vmatpush1.bf16.msra.mxu0 0
    %98 = vmatprep.subr.bf16.mxu0 0
    %99 = vmatpush1.bf16.msra.mxu0 0
    %100 = vmatprep.mubr.bf16.mxu0 0
    %101 = vmatmul.mubr.bf16.gmra.mrb[0].mxu0 %v66
    %v102 = vpop.f32.mrb[0].mxu0
    %v103 = vadd.f32 %v38, %v102
    %v104 = vpop.f32.mrb[0].mxu0
    %v105 = vpop.f32.mrb[0].mxu0
    %v106 = vpop.f32.mrb[0].mxu0
    %107 = vdwg.mxu0
    %v108 = vpack.c.bf16 %v103, %v103
    %vm109 = vcmask 130048
    %v111 = vsel %vm109, %v23, 0
    %v114 = vsel %vm109, %v108, 0
    %116 = vmatprep.subr.bf16.mxu0 0
    %117 = vmatpush1.bf16.xpose.msra.mxu0 %v114
    %118 = vmatprep.subr.bf16.mxu0 0
    %119 = vmatpush1.bf16.xpose.msra.mxu0 0
    %120 = vmatprep.subr.bf16.mxu0 0
    %121 = vmatpush1.bf16.xpose.msra.mxu0 0
    %122 = vmatprep.subr.bf16.mxu0 0
    %123 = vmatpush1.bf16.xpose.msra.mxu0 0
    %124 = vmatprep.subr.bf16.mxu0 0
    %125 = vmatpush1.bf16.xpose.msra.mxu0 0
    %126 = vmatprep.subr.bf16.mxu0 0
    %127 = vmatpush1.bf16.xpose.msra.mxu0 0
    %128 = vmatprep.subr.bf16.mxu0 0
    %129 = vmatpush1.bf16.xpose.msra.mxu0 0
    %130 = vmatprep.subr.bf16.mxu0 0
    %131 = vmatpush1.bf16.xpose.msra.mxu0 0
    %132 = vmatprep.subr.bf16.mxu0 0
    %133 = vmatpush1.bf16.xpose.msra.mxu0 0
    %134 = vmatprep.subr.bf16.mxu0 0
    %135 = vmatpush1.bf16.xpose.msra.mxu0 0
    %136 = vmatprep.subr.bf16.mxu0 0
    %137 = vmatpush1.bf16.xpose.msra.mxu0 0
    %138 = vmatprep.subr.bf16.mxu0 0
    %139 = vmatpush1.bf16.xpose.msra.mxu0 0
    %140 = vmatprep.subr.bf16.mxu0 0
    %141 = vmatpush1.bf16.xpose.msra.mxu0 0
    %142 = vmatprep.subr.bf16.mxu0 0
    %143 = vmatpush1.bf16.xpose.msra.mxu0 0
    %144 = vmatprep.subr.bf16.mxu0 0
    %145 = vmatpush1.bf16.xpose.msra.mxu0 0
    %146 = vmatprep.subr.bf16.mxu0 0
    %147 = vmatpush1.bf16.xpose.msra.mxu0 0
    %148 = vmatprep.mubr.bf16.mxu0 0
    %149 = vmatmul.mubr.bf16.gmra.mrb[0].mxu0 %v111
    %v150 = vpop.f32.mrb[0].mxu0
    %v151 = vadd.f32 0.0, %v150
    %v152 = vpop.f32.mrb[0].mxu0
    %v153 = vpop.f32.mrb[0].mxu0
    %v154 = vpop.f32.mrb[0].mxu0
    %155 = vdwg.mxu0
    %vm156 = vcmask 64512
    %v157 = vsel %vm156, %v151, -inf
    %v158 = vrot.slane %v157, 4
    %v159 = vmax.f32 %v157, %v158
    %v160 = vrot.slane %v159, 2
    %v161 = vmax.f32 %v159, %v160
    %v162 = vrot.slane %v161, 1
    %v163 = vmax.f32 %v161, %v162
    %v164 = vsub.f32 %v151, %v163
    %v165 = vmul.f32 %v164, 1.442695
    %v166 = vpow.pop %v165
    %v167 = vpack.c.bf16 %v166, %v166
    %v169 = vsel %vm156, %v24, 0
    %vm171 = vcmask 1043456
    %v173 = vsel %vm171, %v167, 0
    %175 = vmatprep.subr.bf16.mxu0 0
    %176 = vmatpush1.bf16.msra.mxu0 %v173
    %177 = vmatprep.subr.bf16.mxu0 0
    %178 = vmatpush1.bf16.msra.mxu0 0
    %179 = vmatprep.subr.bf16.mxu0 0
    %180 = vmatpush1.bf16.msra.mxu0 0
    %181 = vmatprep.subr.bf16.mxu0 0
    %182 = vmatpush1.bf16.msra.mxu0 0
    %183 = vmatprep.subr.bf16.mxu0 0
    %184 = vmatpush1.bf16.msra.mxu0 0
    %185 = vmatprep.subr.bf16.mxu0 0
    %186 = vmatpush1.bf16.msra.mxu0 0
    %187 = vmatprep.subr.bf16.mxu0 0
    %188 = vmatpush1.bf16.msra.mxu0 0
    %189 = vmatprep.subr.bf16.mxu0 0
    %190 = vmatpush1.bf16.msra.mxu0 0
    %191 = vmatprep.subr.bf16.mxu0 0
    %192 = vmatpush1.bf16.msra.mxu0 0
    %193 = vmatprep.subr.bf16.mxu0 0
    %194 = vmatpush1.bf16.msra.mxu0 0
    %195 = vmatprep.subr.bf16.mxu0 0
    %196 = vmatpush1.bf16.msra.mxu0 0
    %197 = vmatprep.subr.bf16.mxu0 0
    %198 = vmatpush1.bf16.msra.mxu0 0
    %199 = vmatprep.subr.bf16.mxu0 0
    %200 = vmatpush1.bf16.msra.mxu0 0
    %201 = vmatprep.subr.bf16.mxu0 0
    %202 = vmatpush1.bf16.msra.mxu0 0
    %203 = vmatprep.subr.bf16.mxu0 0
    %204 = vmatpush1.bf16.msra.mxu0 0
    %205 = vmatprep.subr.bf16.mxu0 0
    %206 = vmatpush1.bf16.msra.mxu0 0
    %207 = vmatprep.mubr.bf16.mxu0 0
    %208 = vmatmul.mubr.bf16.gmra.mrb[0].mxu0 %v169
    %v209 = vpop.f32.mrb[0].mxu0
    %v210 = vadd.f32 0.0, %v209
    %v211 = vpop.f32.mrb[0].mxu0
    %v212 = vpop.f32.mrb[0].mxu0
    %v213 = vpop.f32.mrb[0].mxu0
    %214 = vdwg.mxu0
    %v215 = vrcp.pop %v210
    %v217 = vrot.slane %v215, 1
    %v219 = vmul.f32 %v210, %v217
    %v220 = vadd.f32 %v219, 0.0
    %v222 = vunpack.c.l.b16 %v23
    %v223 = vpack.c.b16 %v222, %v222
    %224 = vrot.lane.b32.xlu0 %v223, 112
    %v225 = vpop.permute.xlu0 %224
    %227 = vrot.lane.b32.xlu0 %v108, 112
    %v228 = vpop.permute.xlu0 %227
    %v230 = vsel %vm109, %v225, 0
    %v233 = vsel %vm109, %v228, 0
    %235 = vmatprep.subr.bf16.mxu0 0
    %236 = vmatpush1.bf16.xpose.msra.mxu0 %v233
    %237 = vmatprep.subr.bf16.mxu0 0
    %238 = vmatpush1.bf16.xpose.msra.mxu0 0
    %239 = vmatprep.subr.bf16.mxu0 0
    %240 = vmatpush1.bf16.xpose.msra.mxu0 0
    %241 = vmatprep.subr.bf16.mxu0 0
    %242 = vmatpush1.bf16.xpose.msra.mxu0 0
    %243 = vmatprep.subr.bf16.mxu0 0
    %244 = vmatpush1.bf16.xpose.msra.mxu0 0
    %245 = vmatprep.subr.bf16.mxu0 0
    %246 = vmatpush1.bf16.xpose.msra.mxu0 0
    %247 = vmatprep.subr.bf16.mxu0 0
    %248 = vmatpush1.bf16.xpose.msra.mxu0 0
    %249 = vmatprep.subr.bf16.mxu0 0
    %250 = vmatpush1.bf16.xpose.msra.mxu0 0
    %251 = vmatprep.subr.bf16.mxu0 0
    %252 = vmatpush1.bf16.xpose.msra.mxu0 0
    %253 = vmatprep.subr.bf16.mxu0 0
    %254 = vmatpush1.bf16.xpose.msra.mxu0 0
    %255 = vmatprep.subr.bf16.mxu0 0
    %256 = vmatpush1.bf16.xpose.msra.mxu0 0
    %257 = vmatprep.subr.bf16.mxu0 0
    %258 = vmatpush1.bf16.xpose.msra.mxu0 0
    %259 = vmatprep.subr.bf16.mxu0 0
    %260 = vmatpush1.bf16.xpose.msra.mxu0 0
    %261 = vmatprep.subr.bf16.mxu0 0
    %262 = vmatpush1.bf16.xpose.msra.mxu0 0
    %263 = vmatprep.subr.bf16.mxu0 0
    %264 = vmatpush1.bf16.xpose.msra.mxu0 0
    %265 = vmatprep.subr.bf16.mxu0 0
    %266 = vmatpush1.bf16.xpose.msra.mxu0 0
    %267 = vmatprep.mubr.bf16.mxu0 0
    %268 = vmatmul.mubr.bf16.gmra.mrb[0].mxu0 %v230
    %v269 = vpop.f32.mrb[0].mxu0
    %v270 = vadd.f32 0.0, %v269
    %v271 = vpop.f32.mrb[0].mxu0
    %v272 = vpop.f32.mrb[0].mxu0
    %v273 = vpop.f32.mrb[0].mxu0
    %274 = vdwg.mxu0
    %v275 = vsel %vm156, %v270, -inf
    %v276 = vrot.slane %v275, 4
    %v277 = vmax.f32 %v275, %v276
    %v278 = vrot.slane %v277, 2
    %v279 = vmax.f32 %v277, %v278
    %v280 = vrot.slane %v279, 1
    %v281 = vmax.f32 %v279, %v280
    %v282 = vsub.f32 %v270, %v281
    %v283 = vmul.f32 %v282, 1.442695
    %v284 = vpow.pop %v283
    %v285 = vpack.c.bf16 %v284, %v284
    %v287 = vunpack.c.l.b16 %v24
    %v288 = vpack.c.b16 %v287, %v287
    %v289 = vrot.slane %v288, 1
    %v291 = vsel %vm156, %v289, 0
    %v294 = vsel %vm171, %v285, 0
    %296 = vmatprep.subr.bf16.mxu0 0
    %297 = vmatpush1.bf16.msra.mxu0 %v294
    %298 = vmatprep.subr.bf16.mxu0 0
    %299 = vmatpush1.bf16.msra.mxu0 0
    %300 = vmatprep.subr.bf16.mxu0 0
    %301 = vmatpush1.bf16.msra.mxu0 0
    %302 = vmatprep.subr.bf16.mxu0 0
    %303 = vmatpush1.bf16.msra.mxu0 0
    %304 = vmatprep.subr.bf16.mxu0 0
    %305 = vmatpush1.bf16.msra.mxu0 0
    %306 = vmatprep.subr.bf16.mxu0 0
    %307 = vmatpush1.bf16.msra.mxu0 0
    %308 = vmatprep.subr.bf16.mxu0 0
    %309 = vmatpush1.bf16.msra.mxu0 0
    %310 = vmatprep.subr.bf16.mxu0 0
    %311 = vmatpush1.bf16.msra.mxu0 0
    %312 = vmatprep.subr.bf16.mxu0 0
    %313 = vmatpush1.bf16.msra.mxu0 0
    %314 = vmatprep.subr.bf16.mxu0 0
    %315 = vmatpush1.bf16.msra.mxu0 0
    %316 = vmatprep.subr.bf16.mxu0 0
    %317 = vmatpush1.bf16.msra.mxu0 0
    %318 = vmatprep.subr.bf16.mxu0 0
    %319 = vmatpush1.bf16.msra.mxu0 0
    %320 = vmatprep.subr.bf16.mxu0 0
    %321 = vmatpush1.bf16.msra.mxu0 0
    %322 = vmatprep.subr.bf16.mxu0 0
    %323 = vmatpush1.bf16.msra.mxu0 0
    %324 = vmatprep.subr.bf16.mxu0 0
    %325 = vmatpush1.bf16.msra.mxu0 0
    %326 = vmatprep.subr.bf16.mxu0 0
    %327 = vmatpush1.bf16.msra.mxu0 0
    %328 = vmatprep.mubr.bf16.mxu0 0
    %329 = vmatmul.mubr.bf16.gmra.mrb[0].mxu0 %v291
    %v330 = vpop.f32.mrb[0].mxu0
    %v331 = vadd.f32 0.0, %v330
    %v332 = vpop.f32.mrb[0].mxu0
    %v333 = vpop.f32.mrb[0].mxu0
    %v334 = vpop.f32.mrb[0].mxu0
    %335 = vdwg.mxu0
    %v336 = vrcp.pop %v331
    %v338 = vrot.slane %v336, 1
    %v340 = vmul.f32 %v331, %v338
    %v341 = vadd.f32 %v220, %v340
    %342 = vrot.lane.b32.xlu0 %v223, 96
    %v343 = vpop.permute.xlu0 %342
    %344 = vrot.lane.b32.xlu0 %v108, 96
    %v345 = vpop.permute.xlu0 %344
    %v347 = vsel %vm109, %v343, 0
    %v350 = vsel %vm109, %v345, 0
    %352 = vmatprep.subr.bf16.mxu0 0
    %353 = vmatpush1.bf16.xpose.msra.mxu0 %v350
    %354 = vmatprep.subr.bf16.mxu0 0
    %355 = vmatpush1.bf16.xpose.msra.mxu0 0
    %356 = vmatprep.subr.bf16.mxu0 0
    %357 = vmatpush1.bf16.xpose.msra.mxu0 0
    %358 = vmatprep.subr.bf16.mxu0 0
    %359 = vmatpush1.bf16.xpose.msra.mxu0 0
    %360 = vmatprep.subr.bf16.mxu0 0
    %361 = vmatpush1.bf16.xpose.msra.mxu0 0
    %362 = vmatprep.subr.bf16.mxu0 0
    %363 = vmatpush1.bf16.xpose.msra.mxu0 0
    %364 = vmatprep.subr.bf16.mxu0 0
    %365 = vmatpush1.bf16.xpose.msra.mxu0 0
    %366 = vmatprep.subr.bf16.mxu0 0
    %367 = vmatpush1.bf16.xpose.msra.mxu0 0
    %368 = vmatprep.subr.bf16.mxu0 0
    %369 = vmatpush1.bf16.xpose.msra.mxu0 0
    %370 = vmatprep.subr.bf16.mxu0 0
    %371 = vmatpush1.bf16.xpose.msra.mxu0 0
    %372 = vmatprep.subr.bf16.mxu0 0
    %373 = vmatpush1.bf16.xpose.msra.mxu0 0
    %374 = vmatprep.subr.bf16.mxu0 0
    %375 = vmatpush1.bf16.xpose.msra.mxu0 0
    %376 = vmatprep.subr.bf16.mxu0 0
    %377 = vmatpush1.bf16.xpose.msra.mxu0 0
    %378 = vmatprep.subr.bf16.mxu0 0
    %379 = vmatpush1.bf16.xpose.msra.mxu0 0
    %380 = vmatprep.subr.bf16.mxu0 0
    %381 = vmatpush1.bf16.xpose.msra.mxu0 0
    %382 = vmatprep.subr.bf16.mxu0 0
    %383 = vmatpush1.bf16.xpose.msra.mxu0 0
    %384 = vmatprep.mubr.bf16.mxu0 0
    %385 = vmatmul.mubr.bf16.gmra.mrb[0].mxu0 %v347
    %v386 = vpop.f32.mrb[0].mxu0
    %v387 = vadd.f32 0.0, %v386
    %v388 = vpop.f32.mrb[0].mxu0
    %v389 = vpop.f32.mrb[0].mxu0
    %v390 = vpop.f32.mrb[0].mxu0
    %391 = vdwg.mxu0
    %v392 = vsel %vm156, %v387, -inf
    %v393 = vrot.slane %v392, 4
    %v394 = vmax.f32 %v392, %v393
    %v395 = vrot.slane %v394, 2
    %v396 = vmax.f32 %v394, %v395
    %v397 = vrot.slane %v396, 1
    %v398 = vmax.f32 %v396, %v397
    %v399 = vsub.f32 %v387, %v398
    %v400 = vmul.f32 %v399, 1.442695
    %v401 = vpow.pop %v400
    %v402 = vpack.c.bf16 %v401, %v401
    %v403 = vrot.slane %v288, 2
    %v405 = vsel %vm156, %v403, 0
    %v408 = vsel %vm171, %v402, 0
    %410 = vmatprep.subr.bf16.mxu0 0
    %411 = vmatpush1.bf16.msra.mxu0 %v408
    %412 = vmatprep.subr.bf16.mxu0 0
    %413 = vmatpush1.bf16.msra.mxu0 0
    %414 = vmatprep.subr.bf16.mxu0 0
    %415 = vmatpush1.bf16.msra.mxu0 0
    %416 = vmatprep.subr.bf16.mxu0 0
    %417 = vmatpush1.bf16.msra.mxu0 0
    %418 = vmatprep.subr.bf16.mxu0 0
    %419 = vmatpush1.bf16.msra.mxu0 0
    %420 = vmatprep.subr.bf16.mxu0 0
    %421 = vmatpush1.bf16.msra.mxu0 0
    %422 = vmatprep.subr.bf16.mxu0 0
    %423 = vmatpush1.bf16.msra.mxu0 0
    %424 = vmatprep.subr.bf16.mxu0 0
    %425 = vmatpush1.bf16.msra.mxu0 0
    %426 = vmatprep.subr.bf16.mxu0 0
    %427 = vmatpush1.bf16.msra.mxu0 0
    %428 = vmatprep.subr.bf16.mxu0 0
    %429 = vmatpush1.bf16.msra.mxu0 0
    %430 = vmatprep.subr.bf16.mxu0 0
    %431 = vmatpush1.bf16.msra.mxu0 0
    %432 = vmatprep.subr.bf16.mxu0 0
    %433 = vmatpush1.bf16.msra.mxu0 0
    %434 = vmatprep.subr.bf16.mxu0 0
    %435 = vmatpush1.bf16.msra.mxu0 0
    %436 = vmatprep.subr.bf16.mxu0 0
    %437 = vmatpush1.bf16.msra.mxu0 0
    %438 = vmatprep.subr.bf16.mxu0 0
    %439 = vmatpush1.bf16.msra.mxu0 0
    %440 = vmatprep.subr.bf16.mxu0 0
    %441 = vmatpush1.bf16.msra.mxu0 0
    %442 = vmatprep.mubr.bf16.mxu0 0
    %443 = vmatmul.mubr.bf16.gmra.mrb[0].mxu0 %v405
    %v444 = vpop.f32.mrb[0].mxu0
    %v445 = vadd.f32 0.0, %v444
    %v446 = vpop.f32.mrb[0].mxu0
    %v447 = vpop.f32.mrb[0].mxu0
    %v448 = vpop.f32.mrb[0].mxu0
    %449 = vdwg.mxu0
    %v450 = vrcp.pop %v445
    %v452 = vrot.slane %v450, 1
    %v454 = vmul.f32 %v445, %v452
    %v455 = vadd.f32 %v341, %v454
    %456 = vrot.lane.b32.xlu0 %v223, 80
    %v457 = vpop.permute.xlu0 %456
    %458 = vrot.lane.b32.xlu0 %v108, 80
    %v459 = vpop.permute.xlu0 %458
    %v461 = vsel %vm109, %v457, 0
    %v464 = vsel %vm109, %v459, 0
    %466 = vmatprep.subr.bf16.mxu0 0
    %467 = vmatpush1.bf16.xpose.msra.mxu0 %v464
    %468 = vmatprep.subr.bf16.mxu0 0
    %469 = vmatpush1.bf16.xpose.msra.mxu0 0
    %470 = vmatprep.subr.bf16.mxu0 0
    %471 = vmatpush1.bf16.xpose.msra.mxu0 0
    %472 = vmatprep.subr.bf16.mxu0 0
    %473 = vmatpush1.bf16.xpose.msra.mxu0 0
    %474 = vmatprep.subr.bf16.mxu0 0
    %475 = vmatpush1.bf16.xpose.msra.mxu0 0
    %476 = vmatprep.subr.bf16.mxu0 0
    %477 = vmatpush1.bf16.xpose.msra.mxu0 0
    %478 = vmatprep.subr.bf16.mxu0 0
    %479 = vmatpush1.bf16.xpose.msra.mxu0 0
    %480 = vmatprep.subr.bf16.mxu0 0
    %481 = vmatpush1.bf16.xpose.msra.mxu0 0
    %482 = vmatprep.subr.bf16.mxu0 0
    %483 = vmatpush1.bf16.xpose.msra.mxu0 0
    %484 = vmatprep.subr.bf16.mxu0 0
    %485 = vmatpush1.bf16.xpose.msra.mxu0 0
    %486 = vmatprep.subr.bf16.mxu0 0
    %487 = vmatpush1.bf16.xpose.msra.mxu0 0
    %488 = vmatprep.subr.bf16.mxu0 0
    %489 = vmatpush1.bf16.xpose.msra.mxu0 0
    %490 = vmatprep.subr.bf16.mxu0 0
    %491 = vmatpush1.bf16.xpose.msra.mxu0 0
    %492 = vmatprep.subr.bf16.mxu0 0
    %493 = vmatpush1.bf16.xpose.msra.mxu0 0
    %494 = vmatprep.subr.bf16.mxu0 0
    %495 = vmatpush1.bf16.xpose.msra.mxu0 0
    %496 = vmatprep.subr.bf16.mxu0 0
    %497 = vmatpush1.bf16.xpose.msra.mxu0 0
    %498 = vmatprep.mubr.bf16.mxu0 0
    %499 = vmatmul.mubr.bf16.gmra.mrb[0].mxu0 %v461
    %v500 = vpop.f32.mrb[0].mxu0
    %v501 = vadd.f32 0.0, %v500
    %v502 = vpop.f32.mrb[0].mxu0
    %v503 = vpop.f32.mrb[0].mxu0
    %v504 = vpop.f32.mrb[0].mxu0
    %505 = vdwg.mxu0
    %v506 = vsel %vm156, %v501, -inf
    %v507 = vrot.slane %v506, 4
    %v508 = vmax.f32 %v506, %v507
    %v509 = vrot.slane %v508, 2
    %v510 = vmax.f32 %v508, %v509
    %v511 = vrot.slane %v510, 1
    %v512 = vmax.f32 %v510, %v511
    %v513 = vsub.f32 %v501, %v512
    %v514 = vmul.f32 %v513, 1.442695
    %v515 = vpow.pop %v514
    %v516 = vpack.c.bf16 %v515, %v515
    %v517 = vrot.slane %v288, 3
    %v519 = vsel %vm156, %v517, 0
    %v522 = vsel %vm171, %v516, 0
    %524 = vmatprep.subr.bf16.mxu0 0
    %525 = vmatpush1.bf16.msra.mxu0 %v522
    %526 = vmatprep.subr.bf16.mxu0 0
    %527 = vmatpush1.bf16.msra.mxu0 0
    %528 = vmatprep.subr.bf16.mxu0 0
    %529 = vmatpush1.bf16.msra.mxu0 0
    %530 = vmatprep.subr.bf16.mxu0 0
    %531 = vmatpush1.bf16.msra.mxu0 0
    %532 = vmatprep.subr.bf16.mxu0 0
    %533 = vmatpush1.bf16.msra.mxu0 0
    %534 = vmatprep.subr.bf16.mxu0 0
    %535 = vmatpush1.bf16.msra.mxu0 0
    %536 = vmatprep.subr.bf16.mxu0 0
    %537 = vmatpush1.bf16.msra.mxu0 0
    %538 = vmatprep.subr.bf16.mxu0 0
    %539 = vmatpush1.bf16.msra.mxu0 0
    %540 = vmatprep.subr.bf16.mxu0 0
    %541 = vmatpush1.bf16.msra.mxu0 0
    %542 = vmatprep.subr.bf16.mxu0 0
    %543 = vmatpush1.bf16.msra.mxu0 0
    %544 = vmatprep.subr.bf16.mxu0 0
    %545 = vmatpush1.bf16.msra.mxu0 0
    %546 = vmatprep.subr.bf16.mxu0 0
    %547 = vmatpush1.bf16.msra.mxu0 0
    %548 = vmatprep.subr.bf16.mxu0 0
    %549 = vmatpush1.bf16.msra.mxu0 0
    %550 = vmatprep.subr.bf16.mxu0 0
    %551 = vmatpush1.bf16.msra.mxu0 0
    %552 = vmatprep.subr.bf16.mxu0 0
    %553 = vmatpush1.bf16.msra.mxu0 0
    %554 = vmatprep.subr.bf16.mxu0 0
    %555 = vmatpush1.bf16.msra.mxu0 0
    %556 = vmatprep.mubr.bf16.mxu0 0
    %557 = vmatmul.mubr.bf16.gmra.mrb[0].mxu0 %v519
    %v558 = vpop.f32.mrb[0].mxu0
    %v559 = vadd.f32 0.0, %v558
    %v560 = vpop.f32.mrb[0].mxu0
    %v561 = vpop.f32.mrb[0].mxu0
    %v562 = vpop.f32.mrb[0].mxu0
    %563 = vdwg.mxu0
    %v564 = vrcp.pop %v559
    %v566 = vrot.slane %v564, 1
    %v568 = vmul.f32 %v559, %v566
    %v569 = vadd.f32 %v455, %v568
    %v570 = vxor.u32 %v569, 2147483648
    %v571 = vmul.f32 %v570, 1.442695
    %v572 = vpow.pop %v571
    %v573 = vadd.f32 %v572, 1.0
    %v574 = vrcp.pop %v573
    %v575 = vmul.f32 1.0, %v574
    %v576 = vmul.f32 %v575, 5.0
    %vm577 = vcmask 57344
    %578 = vst.msk [vmem:[#allocation2] sm:$0x1] %vm577, %v576
    // Predicated region
    $region22: #{recipe_model_forward.1} parent=1 // pred_check
      _
    $region23: #{recipe_model_forward.1} parent=1 // pred_check_branch
      %580 = sbr.rel (0) target = $region25
    $region24: #{recipe_model_forward.1} parent=1 // pred_region
      %s582 = ssub.s32 16, 16
      %583 = vsyncadd [#allocation3], %s582
      %s585 = sshll.u32 [#allocation2], 4
      %s586 = int_to_ptr.vmem [resolvable:$true] %s585
      %588 = dma.vmem_to_hbm [thread:$0]  %s586, 16, %s5, [#allocation3]
    $region25: #{recipe_model_forward.1} parent=1 // pred_fallthru
      _
    // Predicated region
    $region26: #{recipe_model_forward.1} parent=1 // pred_check
      _
    $region27: #{recipe_model_forward.1} parent=1 // pred_check_branch
      %590 = sbr.rel (0) target = $region29
    $region28: #{recipe_model_forward.1} parent=1 // pred_region
      %591 = dma.done [#allocation3], 16
    $region29: #{recipe_model_forward.1} parent=1 // pred_fallthru
      _
    %592 = vsyncpa [#allocation3], 1

</llo_original>
